<compile_context>
chip_gen: v6e
topology: v6e:2x2x1
jax: 0.10.0
libtpu: 0.0.40
codegen_flags: <defaults>
</compile_context>

<pallas_src>
import functools

import jax
import jax.numpy as jnp
from jax.experimental import pallas as pl
from jax.experimental.pallas import tpu as pltpu


def _inorm_cin(y, g, b, inv_hw, relu, eps=1e-5):
    """Instance norm over each row (= one sample-channel) + CIN scale/shift."""
    s1 = jnp.sum(y, axis=1, keepdims=True)
    s2 = jnp.sum(y * y, axis=1, keepdims=True)
    m = s1 * inv_hw
    var = s2 * inv_hw - m * m            # single-pass E[y^2] - m^2 (y = O(1), f32)
    xn = (y - m) * jax.lax.rsqrt(var + eps)
    out = xn * g + b
    return jnp.maximum(out, 0.0) if relu else out


def _block_kernel(x_ref, w1_ref, b1_ref, w2_ref, b2_ref,
                  g1_ref, be1_ref, g2_ref, be2_ref, z_ref, taps_ref, *, W):
    rows, HW = x_ref.shape
    inv_hw = 1.0 / HW

    # Column-index masks for the width wrap, shared by both convs.
    col = jax.lax.broadcasted_iota(jnp.int32, (rows, HW), 1) % W
    is_first_col = col == 0
    is_last_col = col == (W - 1)

    def conv(a, w_ref, b_ref):
        # tap[t][r, h*W + w] == a[r, ((h+dh)%H)*W + ((w+dw)%W)],
        # dh, dw in {-1, 0, 1}, t = (dh+1)*3 + (dw+1)  (3x3 raster order).
        #
        # West/east (dw = -1/+1) neighbours, column wrap fixed: 4 rolls + 2 selects.
        # (pltpu.roll follows jnp.roll semantics; shifts kept non-negative.)
        a_e = jnp.where(is_last_col,
                        pltpu.roll(a, W - 1, axis=1),        # a[h, 0]   at w = W-1
                        pltpu.roll(a, HW - 1, axis=1))       # a[h, w+1] elsewhere
        a_w = jnp.where(is_first_col,
                        pltpu.roll(a, HW - W + 1, axis=1),   # a[h, W-1] at w = 0
                        pltpu.roll(a, 1, axis=1))            # a[h, w-1] elsewhere
        # Row (dh = -1/+1) rolls preserve the column index, so they commute
        # with the wrap fixup above: 6 more rolls complete the 9 taps
        # (10 rolls + 2 selects total, vs 14 + 6 in v2).
        up, dn = W, HW - W                                   # dh = -1 / dh = +1
        taps = (pltpu.roll(a_w, up, axis=1), pltpu.roll(a, up, axis=1),
                pltpu.roll(a_e, up, axis=1),
                a_w, a, a_e,
                pltpu.roll(a_w, dn, axis=1), pltpu.roll(a, dn, axis=1),
                pltpu.roll(a_e, dn, axis=1))

        # Stage the (9*rows, HW) MXU RHS into the persistent VMEM scratch via
        # 8-aligned row-block stores (buffer reused by both convs).
        for t, tap in enumerate(taps):
            taps_ref[pl.ds(t * rows, rows), :] = tap

        # One MXU matmul per conv: bf16 operands, f32 accumulation.
        y = jnp.dot(w_ref[...], taps_ref[...].astype(jnp.bfloat16),
                    preferred_element_type=jnp.float32)
        return y + b_ref[...]                                # (rows, HW) + (rows, 1)

    x = x_ref[...]
    # conv1 -> instance norm -> CIN(gamma1, beta1) -> ReLU
    h = _inorm_cin(conv(x, w1_ref, b1_ref), g1_ref[...], be1_ref[...],
                   inv_hw, relu=True)
    # conv2 -> instance norm -> CIN(gamma2, beta2)
    z = _inorm_cin(conv(h, w2_ref, b2_ref), g2_ref[...], be2_ref[...],
                   inv_hw, relu=False)

    z_ref[...] = z.astype(z_ref.dtype)                       # full-width lane-dense store


def _block_diag_conv_weight(w, n_batch):
    """(C, C, 3, 3) conv weight -> (N*C, 9*N*C) block-diagonal matmul weight.

    Entry [n*C + co, t*N*C + n*C + ci] = w[co, ci, kh, kw] with t = kh*3 + kw;
    cross-sample blocks are zero, so one matmul convolves the whole batch.
    """
    C = w.shape[0]
    w_t = jnp.transpose(w, (2, 3, 0, 1)).reshape(9, C, C)    # [t, co, ci]
    eye = jnp.eye(n_batch, dtype=w.dtype)
    big = jnp.einsum("nm,tij->nitmj", eye, w_t)               # (n, co, t, m, ci)
    return big.reshape(n_batch * C, 9 * n_batch * C)


@jax.jit
def conv_cat_block_cin(x, w1, b1, w2, b2, gamma1, beta1, gamma2, beta2):
    N, C, H, W = x.shape
    HW = H * W
    f32, bf16 = jnp.float32, jnp.bfloat16

    x_flat = x.reshape(N * C, HW).astype(f32)                 # lane-dense rows
    wb1 = _block_diag_conv_weight(w1.astype(f32), N).astype(bf16)
    wb2 = _block_diag_conv_weight(w2.astype(f32), N).astype(bf16)
    b1r = jnp.tile(b1.astype(f32), N).reshape(N * C, 1)
    b2r = jnp.tile(b2.astype(f32), N).reshape(N * C, 1)
    g1r = gamma1.astype(f32).reshape(N * C, 1)
    be1r = beta1.astype(f32).reshape(N * C, 1)
    g2r = gamma2.astype(f32).reshape(N * C, 1)
    be2r = beta2.astype(f32).reshape(N * C, 1)

    vmem = pl.BlockSpec(memory_space=pltpu.MemorySpace.VMEM)
    z_flat = pl.pallas_call(
        functools.partial(_block_kernel, W=W),
        out_shape=jax.ShapeDtypeStruct((N * C, HW), f32),
        in_specs=[vmem] * 9,
        out_specs=vmem,
        scratch_shapes=[pltpu.VMEM((9 * N * C, HW), jnp.float32)],
    )(x_flat, wb1, b1r, wb2, b2r, g1r, be1r, g2r, be2r)

    # The unchanged-x half of the channel concat is pure data movement; let
    # XLA do it in the wrapper instead of burning kernel store slots.
    return jnp.concatenate([x, z_flat.reshape(N, C, H, W).astype(x.dtype)], axis=1)


def _reference(x, w1, b1, w2, b2, g1, be1, g2, be2):
    # Pure-JAX mirror of the PyTorch forward. Conv inputs/weights are rounded
    # to bf16 (accumulation stays exact f32 via HIGHEST) to mirror the bf16
    # MXU quantisation the kernel deliberately uses, so this check isolates
    # structural correctness (taps / circular shifts / instance norm / CIN).
    def q(t):
        return t.astype(jnp.bfloat16).astype(jnp.float32)

    def circ_conv(t, w, b):
        tp = jnp.pad(q(t), ((0, 0), (0, 0), (1, 1), (1, 1)), mode="wrap")
        y = jax.lax.conv_general_dilated(
            tp, q(w), window_strides=(1, 1), padding="VALID",
            dimension_numbers=("NCHW", "OIHW", "NCHW"),
            precision=jax.lax.Precision.HIGHEST)
        return y + b[None, :, None, None]

    def inorm(t, eps=1e-5):
        m = jnp.mean(t, axis=(2, 3), keepdims=True)
        v = jnp.mean((t - m) ** 2, axis=(2, 3), keepdims=True)
        return (t - m) / jnp.sqrt(v + eps)

    x2 = inorm(circ_conv(x, w1, b1))
    h = jnp.maximum(x2 * g1[:, :, None, None] + be1[:, :, None, None], 0.0)
    x3 = inorm(circ_conv(h, w2, b2))
    y = x3 * g2[:, :, None, None] + be2[:, :, None, None]
    return jnp.concatenate([x, y], axis=1)


if __name__ == "__main__":
    key = jax.random.PRNGKey(0)
    N, C, H, W = 2, 4, 16, 16
    ks = jax.random.split(key, 9)

    x = jax.random.normal(ks[0], (N, C, H, W), jnp.float32)
    # Deterministic synthetic parameters (shapes from nn.Conv2d(ch, ch, 3, 1, 1)).
    w1 = 0.2 * jax.random.normal(ks[1], (C, C, 3, 3), jnp.float32)
    b1 = 0.1 * jax.random.normal(ks[2], (C,), jnp.float32)
    w2 = 0.2 * jax.random.normal(ks[3], (C, C, 3, 3), jnp.float32)
    b2 = 0.1 * jax.random.normal(ks[4], (C,), jnp.float32)
    gamma1 = 1.0 + 0.1 * jax.random.normal(ks[5], (N, C), jnp.float32)
    beta1 = 0.1 * jax.random.normal(ks[6], (N, C), jnp.float32)
    gamma2 = 1.0 + 0.1 * jax.random.normal(ks[7], (N, C), jnp.float32)
    beta2 = 0.1 * jax.random.normal(ks[8], (N, C), jnp.float32)

    out = conv_cat_block_cin(x, w1, b1, w2, b2, gamma1, beta1, gamma2, beta2)
    out = jax.block_until_ready(out)

    ref = _reference(x, w1, b1, w2, b2, gamma1, beta1, gamma2, beta2)
    assert out.shape == (N, 2 * C, H, W)
    max_err = float(jnp.max(jnp.abs(out - ref)))
    # Both kernel and reference use bf16-quantised conv inputs/weights with f32
    # accumulation, so the residual is f32 summation-order noise plus rare
    # bf16 rounding-boundary divergence on conv2's input (<~few e-3).  Any
    # structural bug (wrong tap / shift / wrap / norm) is O(1), so 1e-2 cleanly
    # separates correct from broken.
    assert max_err < 1e-2, max_err
    print("KERNEL_OK")
</pallas_src>

<mosaic_0001>
module attributes {stable_mosaic.version = 11 : i64} {
  func.func @_block_kernel(%arg0: memref<8x256xf32, #tpu.memory_space<vmem>>, %arg1: memref<8x72xbf16, #tpu.memory_space<vmem>>, %arg2: memref<8x1xf32, #tpu.memory_space<vmem>>, %arg3: memref<8x72xbf16, #tpu.memory_space<vmem>>, %arg4: memref<8x1xf32, #tpu.memory_space<vmem>>, %arg5: memref<8x1xf32, #tpu.memory_space<vmem>>, %arg6: memref<8x1xf32, #tpu.memory_space<vmem>>, %arg7: memref<8x1xf32, #tpu.memory_space<vmem>>, %arg8: memref<8x1xf32, #tpu.memory_space<vmem>>, %arg9: memref<8x256xf32, #tpu.memory_space<vmem>>, %arg10: memref<72x256xf32, #tpu.memory_space<vmem>>) attributes {dimension_semantics = [], scalar_prefetch = 0 : i64, scratch_operands = 1 : i64, tpu.core_type = #tpu.core_type<tc>} {
    %0 = tpu.iota {dimensions = array<i32: 1>} : vector<8x256xi32>
    %c16_i32 = arith.constant 16 : i32
    %c0_i32 = arith.constant 0 : i32
    %1 = arith.cmpi eq, %c16_i32, %c0_i32 : i32
    %c1_i32 = arith.constant 1 : i32
    %2 = arith.select %1, %c1_i32, %c16_i32 : i32
    %3 = vector.broadcast %2 : i32 to vector<8x256xi32>
    %4 = arith.remsi %0, %3 : vector<8x256xi32>
    %c0_i32_0 = arith.constant 0 : i32
    %5 = vector.broadcast %c0_i32_0 : i32 to vector<8x256xi32>
    %6 = arith.cmpi ne, %4, %5 : vector<8x256xi32>
    %c0_i32_1 = arith.constant 0 : i32
    %7 = vector.broadcast %c0_i32_1 : i32 to vector<8x256xi32>
    %8 = arith.cmpi slt, %4, %7 : vector<8x256xi32>
    %c0_i32_2 = arith.constant 0 : i32
    %9 = arith.cmpi slt, %2, %c0_i32_2 : i32
    %10 = vector.broadcast %9 : i1 to vector<8x256xi1>
    %11 = vector.broadcast %10 : vector<8x256xi1> to vector<8x256xi1>
    %12 = arith.xori %8, %11 : vector<8x256xi1>
    %13 = arith.andi %12, %6 : vector<8x256xi1>
    %14 = vector.broadcast %2 : i32 to vector<8x256xi32>
    %15 = arith.addi %4, %14 : vector<8x256xi32>
    %16 = arith.select %13, %15, %4 : vector<8x256xi1>, vector<8x256xi32>
    %c0_i32_3 = arith.constant 0 : i32
    %17 = vector.broadcast %c0_i32_3 : i32 to vector<8x256xi32>
    %18 = arith.cmpi eq, %16, %17 : vector<8x256xi32>
    %c15_i32 = arith.constant 15 : i32
    %19 = vector.broadcast %c15_i32 : i32 to vector<8x256xi32>
    %20 = arith.cmpi eq, %16, %19 : vector<8x256xi32>
    %c0 = arith.constant 0 : index
    %c0_4 = arith.constant 0 : index
    %21 = vector.load %arg0[%c0, %c0_4] : memref<8x256xf32, #tpu.memory_space<vmem>>, vector<8x256xf32>
    %c15_i32_5 = arith.constant 15 : i32
    %22 = tpu.dynamic_rotate %21 by %c15_i32_5 dim 1 : vector<8x256xf32>, i32 -> vector<8x256xf32>
    %c255_i32 = arith.constant 255 : i32
    %23 = tpu.dynamic_rotate %21 by %c255_i32 dim 1 : vector<8x256xf32>, i32 -> vector<8x256xf32>
    %24 = arith.select %20, %22, %23 : vector<8x256xi1>, vector<8x256xf32>
    %c241_i32 = arith.constant 241 : i32
    %25 = tpu.dynamic_rotate %21 by %c241_i32 dim 1 : vector<8x256xf32>, i32 -> vector<8x256xf32>
    %c1_i32_6 = arith.constant 1 : i32
    %26 = tpu.dynamic_rotate %21 by %c1_i32_6 dim 1 : vector<8x256xf32>, i32 -> vector<8x256xf32>
    %27 = arith.select %18, %25, %26 : vector<8x256xi1>, vector<8x256xf32>
    %c16_i32_7 = arith.constant 16 : i32
    %28 = tpu.dynamic_rotate %27 by %c16_i32_7 dim 1 : vector<8x256xf32>, i32 -> vector<8x256xf32>
    %c16_i32_8 = arith.constant 16 : i32
    %29 = tpu.dynamic_rotate %21 by %c16_i32_8 dim 1 : vector<8x256xf32>, i32 -> vector<8x256xf32>
    %c16_i32_9 = arith.constant 16 : i32
    %30 = tpu.dynamic_rotate %24 by %c16_i32_9 dim 1 : vector<8x256xf32>, i32 -> vector<8x256xf32>
    %c240_i32 = arith.constant 240 : i32
    %31 = tpu.dynamic_rotate %27 by %c240_i32 dim 1 : vector<8x256xf32>, i32 -> vector<8x256xf32>
    %c240_i32_10 = arith.constant 240 : i32
    %32 = tpu.dynamic_rotate %21 by %c240_i32_10 dim 1 : vector<8x256xf32>, i32 -> vector<8x256xf32>
    %c240_i32_11 = arith.constant 240 : i32
    %33 = tpu.dynamic_rotate %24 by %c240_i32_11 dim 1 : vector<8x256xf32>, i32 -> vector<8x256xf32>
    %c0_12 = arith.constant 0 : index
    %c0_13 = arith.constant 0 : index
    %34 = vector.load %arg10[%c0_12, %c0_13] : memref<72x256xf32, #tpu.memory_space<vmem>>, vector<8x256xf32>
    tpu.vector_store %arg10[%c0_12, %c0_13], %28 {strides = array<i32>} : memref<72x256xf32, #tpu.memory_space<vmem>>, vector<8x256xf32>,
    %c8 = arith.constant 8 : index
    %c0_14 = arith.constant 0 : index
    %35 = vector.load %arg10[%c8, %c0_14] : memref<72x256xf32, #tpu.memory_space<vmem>>, vector<8x256xf32>
    tpu.vector_store %arg10[%c8, %c0_14], %29 {strides = array<i32>} : memref<72x256xf32, #tpu.memory_space<vmem>>, vector<8x256xf32>,
    %c16 = arith.constant 16 : index
    %c0_15 = arith.constant 0 : index
    %36 = vector.load %arg10[%c16, %c0_15] : memref<72x256xf32, #tpu.memory_space<vmem>>, vector<8x256xf32>
    tpu.vector_store %arg10[%c16, %c0_15], %30 {strides = array<i32>} : memref<72x256xf32, #tpu.memory_space<vmem>>, vector<8x256xf32>,
    %c24 = arith.constant 24 : index
    %c0_16 = arith.constant 0 : index
    %37 = vector.load %arg10[%c24, %c0_16] : memref<72x256xf32, #tpu.memory_space<vmem>>, vector<8x256xf32>
    tpu.vector_store %arg10[%c24, %c0_16], %27 {strides = array<i32>} : memref<72x256xf32, #tpu.memory_space<vmem>>, vector<8x256xf32>,
    %c32 = arith.constant 32 : index
    %c0_17 = arith.constant 0 : index
    %38 = vector.load %arg10[%c32, %c0_17] : memref<72x256xf32, #tpu.memory_space<vmem>>, vector<8x256xf32>
    tpu.vector_store %arg10[%c32, %c0_17], %21 {strides = array<i32>} : memref<72x256xf32, #tpu.memory_space<vmem>>, vector<8x256xf32>,
    %c40 = arith.constant 40 : index
    %c0_18 = arith.constant 0 : index
    %39 = vector.load %arg10[%c40, %c0_18] : memref<72x256xf32, #tpu.memory_space<vmem>>, vector<8x256xf32>
    tpu.vector_store %arg10[%c40, %c0_18], %24 {strides = array<i32>} : memref<72x256xf32, #tpu.memory_space<vmem>>, vector<8x256xf32>,
    %c48 = arith.constant 48 : index
    %c0_19 = arith.constant 0 : index
    %40 = vector.load %arg10[%c48, %c0_19] : memref<72x256xf32, #tpu.memory_space<vmem>>, vector<8x256xf32>
    tpu.vector_store %arg10[%c48, %c0_19], %31 {strides = array<i32>} : memref<72x256xf32, #tpu.memory_space<vmem>>, vector<8x256xf32>,
    %c56 = arith.constant 56 : index
    %c0_20 = arith.constant 0 : index
    %41 = vector.load %arg10[%c56, %c0_20] : memref<72x256xf32, #tpu.memory_space<vmem>>, vector<8x256xf32>
    tpu.vector_store %arg10[%c56, %c0_20], %32 {strides = array<i32>} : memref<72x256xf32, #tpu.memory_space<vmem>>, vector<8x256xf32>,
    %c64 = arith.constant 64 : index
    %c0_21 = arith.constant 0 : index
    %42 = vector.load %arg10[%c64, %c0_21] : memref<72x256xf32, #tpu.memory_space<vmem>>, vector<8x256xf32>
    tpu.vector_store %arg10[%c64, %c0_21], %33 {strides = array<i32>} : memref<72x256xf32, #tpu.memory_space<vmem>>, vector<8x256xf32>,
    %c0_22 = arith.constant 0 : index
    %c0_23 = arith.constant 0 : index
    %43 = vector.load %arg1[%c0_22, %c0_23] : memref<8x72xbf16, #tpu.memory_space<vmem>>, vector<8x72xbf16>
    %c0_24 = arith.constant 0 : index
    %c0_25 = arith.constant 0 : index
    %44 = vector.load %arg10[%c0_24, %c0_25] : memref<72x256xf32, #tpu.memory_space<vmem>>, vector<72x256xf32>
    %45 = arith.truncf %44 : vector<72x256xf32> to vector<72x256xbf16>
    %cst = arith.constant dense<0.000000e+00> : vector<8x256xf32>
    %46 = tpu.matmul %43, %45, %cst {dimension_numbers = #tpu.dot_dimension_numbers<[1], [0], [0], [1], [0, 0, 1, 1], [], []>} : vector<8x72xbf16>, vector<72x256xbf16>, vector<8x256xf32> -> vector<8x256xf32>
    %c0_26 = arith.constant 0 : index
    %c0_27 = arith.constant 0 : index
    %47 = vector.load %arg2[%c0_26, %c0_27] : memref<8x1xf32, #tpu.memory_space<vmem>>, vector<8x1xf32>
    %48 = vector.broadcast %47 : vector<8x1xf32> to vector<8x256xf32>
    %49 = arith.addf %46, %48 : vector<8x256xf32>
    %c0_28 = arith.constant 0 : index
    %c0_29 = arith.constant 0 : index
    %50 = vector.load %arg5[%c0_28, %c0_29] : memref<8x1xf32, #tpu.memory_space<vmem>>, vector<8x1xf32>
    %c0_30 = arith.constant 0 : index
    %c0_31 = arith.constant 0 : index
    %51 = vector.load %arg6[%c0_30, %c0_31] : memref<8x1xf32, #tpu.memory_space<vmem>>, vector<8x1xf32>
    %cst_32 = arith.constant dense<0.000000e+00> : vector<8xf32>
    %52 = vector.multi_reduction <add>, %49, %cst_32 [1] : vector<8x256xf32> to vector<8xf32>
    %53 = vector.shape_cast %52 : vector<8xf32> to vector<8x1xf32>
    %54 = arith.mulf %49, %49 : vector<8x256xf32>
    %cst_33 = arith.constant dense<0.000000e+00> : vector<8xf32>
    %55 = vector.multi_reduction <add>, %54, %cst_33 [1] : vector<8x256xf32> to vector<8xf32>
    %56 = vector.shape_cast %55 : vector<8xf32> to vector<8x1xf32>
    %cst_34 = arith.constant 3.906250e-03 : f32
    %57 = vector.broadcast %cst_34 : f32 to vector<8x1xf32>
    %58 = arith.mulf %53, %57 : vector<8x1xf32>
    %cst_35 = arith.constant 3.906250e-03 : f32
    %59 = vector.broadcast %cst_35 : f32 to vector<8x1xf32>
    %60 = arith.mulf %56, %59 : vector<8x1xf32>
    %61 = arith.mulf %58, %58 : vector<8x1xf32>
    %62 = arith.subf %60, %61 : vector<8x1xf32>
    %63 = vector.broadcast %58 : vector<8x1xf32> to vector<8x256xf32>
    %64 = arith.subf %49, %63 : vector<8x256xf32>
    %cst_36 = arith.constant 9.99999974E-6 : f32
    %65 = vector.broadcast %cst_36 : f32 to vector<8x1xf32>
    %66 = arith.addf %62, %65 : vector<8x1xf32>
    %67 = math.rsqrt %66 : vector<8x1xf32>
    %68 = vector.broadcast %67 : vector<8x1xf32> to vector<8x256xf32>
    %69 = arith.mulf %64, %68 : vector<8x256xf32>
    %70 = vector.broadcast %50 : vector<8x1xf32> to vector<8x256xf32>
    %71 = arith.mulf %69, %70 : vector<8x256xf32>
    %72 = vector.broadcast %51 : vector<8x1xf32> to vector<8x256xf32>
    %73 = arith.addf %71, %72 : vector<8x256xf32>
    %cst_37 = arith.constant 0.000000e+00 : f32
    %74 = vector.broadcast %cst_37 : f32 to vector<8x256xf32>
    %75 = arith.maximumf %73, %74 : vector<8x256xf32>
    %c15_i32_38 = arith.constant 15 : i32
    %76 = tpu.dynamic_rotate %75 by %c15_i32_38 dim 1 : vector<8x256xf32>, i32 -> vector<8x256xf32>
    %c255_i32_39 = arith.constant 255 : i32
    %77 = tpu.dynamic_rotate %75 by %c255_i32_39 dim 1 : vector<8x256xf32>, i32 -> vector<8x256xf32>
    %78 = arith.select %20, %76, %77 : vector<8x256xi1>, vector<8x256xf32>
    %c241_i32_40 = arith.constant 241 : i32
    %79 = tpu.dynamic_rotate %75 by %c241_i32_40 dim 1 : vector<8x256xf32>, i32 -> vector<8x256xf32>
    %c1_i32_41 = arith.constant 1 : i32
    %80 = tpu.dynamic_rotate %75 by %c1_i32_41 dim 1 : vector<8x256xf32>, i32 -> vector<8x256xf32>
    %81 = arith.select %18, %79, %80 : vector<8x256xi1>, vector<8x256xf32>
    %c16_i32_42 = arith.constant 16 : i32
    %82 = tpu.dynamic_rotate %81 by %c16_i32_42 dim 1 : vector<8x256xf32>, i32 -> vector<8x256xf32>
    %c16_i32_43 = arith.constant 16 : i32
    %83 = tpu.dynamic_rotate %75 by %c16_i32_43 dim 1 : vector<8x256xf32>, i32 -> vector<8x256xf32>
    %c16_i32_44 = arith.constant 16 : i32
    %84 = tpu.dynamic_rotate %78 by %c16_i32_44 dim 1 : vector<8x256xf32>, i32 -> vector<8x256xf32>
    %c240_i32_45 = arith.constant 240 : i32
    %85 = tpu.dynamic_rotate %81 by %c240_i32_45 dim 1 : vector<8x256xf32>, i32 -> vector<8x256xf32>
    %c240_i32_46 = arith.constant 240 : i32
    %86 = tpu.dynamic_rotate %75 by %c240_i32_46 dim 1 : vector<8x256xf32>, i32 -> vector<8x256xf32>
    %c240_i32_47 = arith.constant 240 : i32
    %87 = tpu.dynamic_rotate %78 by %c240_i32_47 dim 1 : vector<8x256xf32>, i32 -> vector<8x256xf32>
    %c0_48 = arith.constant 0 : index
    %c0_49 = arith.constant 0 : index
    %88 = vector.load %arg10[%c0_48, %c0_49] : memref<72x256xf32, #tpu.memory_space<vmem>>, vector<8x256xf32>
    tpu.vector_store %arg10[%c0_48, %c0_49], %82 {strides = array<i32>} : memref<72x256xf32, #tpu.memory_space<vmem>>, vector<8x256xf32>,
    %c8_50 = arith.constant 8 : index
    %c0_51 = arith.constant 0 : index
    %89 = vector.load %arg10[%c8_50, %c0_51] : memref<72x256xf32, #tpu.memory_space<vmem>>, vector<8x256xf32>
    tpu.vector_store %arg10[%c8_50, %c0_51], %83 {strides = array<i32>} : memref<72x256xf32, #tpu.memory_space<vmem>>, vector<8x256xf32>,
    %c16_52 = arith.constant 16 : index
    %c0_53 = arith.constant 0 : index
    %90 = vector.load %arg10[%c16_52, %c0_53] : memref<72x256xf32, #tpu.memory_space<vmem>>, vector<8x256xf32>
    tpu.vector_store %arg10[%c16_52, %c0_53], %84 {strides = array<i32>} : memref<72x256xf32, #tpu.memory_space<vmem>>, vector<8x256xf32>,
    %c24_54 = arith.constant 24 : index
    %c0_55 = arith.constant 0 : index
    %91 = vector.load %arg10[%c24_54, %c0_55] : memref<72x256xf32, #tpu.memory_space<vmem>>, vector<8x256xf32>
    tpu.vector_store %arg10[%c24_54, %c0_55], %81 {strides = array<i32>} : memref<72x256xf32, #tpu.memory_space<vmem>>, vector<8x256xf32>,
    %c32_56 = arith.constant 32 : index
    %c0_57 = arith.constant 0 : index
    %92 = vector.load %arg10[%c32_56, %c0_57] : memref<72x256xf32, #tpu.memory_space<vmem>>, vector<8x256xf32>
    tpu.vector_store %arg10[%c32_56, %c0_57], %75 {strides = array<i32>} : memref<72x256xf32, #tpu.memory_space<vmem>>, vector<8x256xf32>,
    %c40_58 = arith.constant 40 : index
    %c0_59 = arith.constant 0 : index
    %93 = vector.load %arg10[%c40_58, %c0_59] : memref<72x256xf32, #tpu.memory_space<vmem>>, vector<8x256xf32>
    tpu.vector_store %arg10[%c40_58, %c0_59], %78 {strides = array<i32>} : memref<72x256xf32, #tpu.memory_space<vmem>>, vector<8x256xf32>,
    %c48_60 = arith.constant 48 : index
    %c0_61 = arith.constant 0 : index
    %94 = vector.load %arg10[%c48_60, %c0_61] : memref<72x256xf32, #tpu.memory_space<vmem>>, vector<8x256xf32>
    tpu.vector_store %arg10[%c48_60, %c0_61], %85 {strides = array<i32>} : memref<72x256xf32, #tpu.memory_space<vmem>>, vector<8x256xf32>,
    %c56_62 = arith.constant 56 : index
    %c0_63 = arith.constant 0 : index
    %95 = vector.load %arg10[%c56_62, %c0_63] : memref<72x256xf32, #tpu.memory_space<vmem>>, vector<8x256xf32>
    tpu.vector_store %arg10[%c56_62, %c0_63], %86 {strides = array<i32>} : memref<72x256xf32, #tpu.memory_space<vmem>>, vector<8x256xf32>,
    %c64_64 = arith.constant 64 : index
    %c0_65 = arith.constant 0 : index
    %96 = vector.load %arg10[%c64_64, %c0_65] : memref<72x256xf32, #tpu.memory_space<vmem>>, vector<8x256xf32>
    tpu.vector_store %arg10[%c64_64, %c0_65], %87 {strides = array<i32>} : memref<72x256xf32, #tpu.memory_space<vmem>>, vector<8x256xf32>,
    %c0_66 = arith.constant 0 : index
    %c0_67 = arith.constant 0 : index
    %97 = vector.load %arg3[%c0_66, %c0_67] : memref<8x72xbf16, #tpu.memory_space<vmem>>, vector<8x72xbf16>
    %c0_68 = arith.constant 0 : index
    %c0_69 = arith.constant 0 : index
    %98 = vector.load %arg10[%c0_68, %c0_69] : memref<72x256xf32, #tpu.memory_space<vmem>>, vector<72x256xf32>
    %99 = arith.truncf %98 : vector<72x256xf32> to vector<72x256xbf16>
    %cst_70 = arith.constant dense<0.000000e+00> : vector<8x256xf32>
    %100 = tpu.matmul %97, %99, %cst_70 {dimension_numbers = #tpu.dot_dimension_numbers<[1], [0], [0], [1], [0, 0, 1, 1], [], []>} : vector<8x72xbf16>, vector<72x256xbf16>, vector<8x256xf32> -> vector<8x256xf32>
    %c0_71 = arith.constant 0 : index
    %c0_72 = arith.constant 0 : index
    %101 = vector.load %arg4[%c0_71, %c0_72] : memref<8x1xf32, #tpu.memory_space<vmem>>, vector<8x1xf32>
    %102 = vector.broadcast %101 : vector<8x1xf32> to vector<8x256xf32>
    %103 = arith.addf %100, %102 : vector<8x256xf32>
    %c0_73 = arith.constant 0 : index
    %c0_74 = arith.constant 0 : index
    %104 = vector.load %arg7[%c0_73, %c0_74] : memref<8x1xf32, #tpu.memory_space<vmem>>, vector<8x1xf32>
    %c0_75 = arith.constant 0 : index
    %c0_76 = arith.constant 0 : index
    %105 = vector.load %arg8[%c0_75, %c0_76] : memref<8x1xf32, #tpu.memory_space<vmem>>, vector<8x1xf32>
    %cst_77 = arith.constant dense<0.000000e+00> : vector<8xf32>
    %106 = vector.multi_reduction <add>, %103, %cst_77 [1] : vector<8x256xf32> to vector<8xf32>
    %107 = vector.shape_cast %106 : vector<8xf32> to vector<8x1xf32>
    %108 = arith.mulf %103, %103 : vector<8x256xf32>
    %cst_78 = arith.constant dense<0.000000e+00> : vector<8xf32>
    %109 = vector.multi_reduction <add>, %108, %cst_78 [1] : vector<8x256xf32> to vector<8xf32>
    %110 = vector.shape_cast %109 : vector<8xf32> to vector<8x1xf32>
    %cst_79 = arith.constant 3.906250e-03 : f32
    %111 = vector.broadcast %cst_79 : f32 to vector<8x1xf32>
    %112 = arith.mulf %107, %111 : vector<8x1xf32>
    %cst_80 = arith.constant 3.906250e-03 : f32
    %113 = vector.broadcast %cst_80 : f32 to vector<8x1xf32>
    %114 = arith.mulf %110, %113 : vector<8x1xf32>
    %115 = arith.mulf %112, %112 : vector<8x1xf32>
    %116 = arith.subf %114, %115 : vector<8x1xf32>
    %117 = vector.broadcast %112 : vector<8x1xf32> to vector<8x256xf32>
    %118 = arith.subf %103, %117 : vector<8x256xf32>
    %cst_81 = arith.constant 9.99999974E-6 : f32
    %119 = vector.broadcast %cst_81 : f32 to vector<8x1xf32>
    %120 = arith.addf %116, %119 : vector<8x1xf32>
    %121 = math.rsqrt %120 : vector<8x1xf32>
    %122 = vector.broadcast %121 : vector<8x1xf32> to vector<8x256xf32>
    %123 = arith.mulf %118, %122 : vector<8x256xf32>
    %124 = vector.broadcast %104 : vector<8x1xf32> to vector<8x256xf32>
    %125 = arith.mulf %123, %124 : vector<8x256xf32>
    %126 = vector.broadcast %105 : vector<8x1xf32> to vector<8x256xf32>
    %127 = arith.addf %125, %126 : vector<8x256xf32>
    %c0_82 = arith.constant 0 : index
    %c0_83 = arith.constant 0 : index
    %128 = vector.load %arg9[%c0_82, %c0_83] : memref<8x256xf32, #tpu.memory_space<vmem>>, vector<8x256xf32>
    tpu.vector_store %arg9[%c0_82, %c0_83], %127 {strides = array<i32>} : memref<8x256xf32, #tpu.memory_space<vmem>>, vector<8x256xf32>,
    return
  }
}

</mosaic_0001>

<llo_original>
// kernel: tile.13
$region0: #{tile.13}
  #allocation0 [shape = 's32[1]{0}', space=sflag, size = 0x4, scoped, tag = 'scoped memory for tile.13']
  %s0 = inlined_call_operand.vmem [shape: f32[4], index: 0, kind: input, shape index: {}]
  %s1 = inlined_call_operand.vmem [shape: f32[2,4], index: 1, kind: output, shape index: {}]
  // Predicated region
  $region2: #{tile.13} parent=0 // pred_check
    _
  $region3: #{tile.13} parent=0 // pred_check_branch
    %3 = sbr.rel (0) target = $region5
  $region4: #{tile.13} parent=0 // pred_region
    _
  $region5: #{tile.13} parent=0 // pred_fallthru
    _
  %v4 = vld [vmem:[%s0] ss:$0 sm:$0xff]
  %5 = vst [vmem:[%s1] sm:$0x3] %v4

// kernel: tile.1
$region0: #{tile.1}
  %s0 = inlined_call_operand.vmem [shape: f32[2,4], index: 0, kind: input, shape index: {}]
  %s1 = inlined_call_operand.vmem [shape: f32[8,1], index: 1, kind: output, shape index: {}]
  $region1: #{tile.1} parent=0
    #allocation0 [shape = 'u8[4096]{0}', space=vmem, size = 0x1000, scoped, tag = 'scoped mem for input reshape']
    %s3 = sshll.u32 1, 2
    %s4 = ssub.s32 %s3, 1
    %v5 = vld [vmem:[%s0] sm:%s4]
    %6 = vst [vmem:[#allocation0] sm:%s4] %v5
    %v7 = vld [vmem:[#allocation0] sm:$0x3]
    %vm8 = vcmask 7168
    %9 = vst.msk [vmem:[%s1] ss:$4 sm:$0x3] %vm8, %v7
    %v10 = vld [vmem:[#allocation0] sm:$0x3]
    %11 = vrot.lane.b32.xlu0 %v10, 127
    %v12 = vpop.permute.xlu0 %11
    %vm13 = vcmask 7168
    %s14 = scalar_lea.vmem %s1, 1
    %15 = vst.msk [vmem:[%s14] ss:$4 sm:$0x3] %vm13, %v12
    %v16 = vld [vmem:[#allocation0] sm:$0x3]
    %17 = vrot.lane.b32.xlu0 %v16, 126
    %v18 = vpop.permute.xlu0 %17
    %vm19 = vcmask 7168
    %s20 = scalar_lea.vmem %s1, 2
    %21 = vst.msk [vmem:[%s20] ss:$4 sm:$0x3] %vm19, %v18
    %v22 = vld [vmem:[#allocation0] sm:$0x3]
    %23 = vrot.lane.b32.xlu0 %v22, 125
    %v24 = vpop.permute.xlu0 %23
    %vm25 = vcmask 7168
    %s26 = scalar_lea.vmem %s1, 3
    %27 = vst.msk [vmem:[%s26] ss:$4 sm:$0x3] %vm25, %v24

// kernel: conv_cat_block_cin.1
$region0: #{conv_cat_block_cin.1}
  #allocation0 [shape = 'u32[]', space=smem, size = 0x4, offset = 0x4, fixed_abs, tag = 'smem constant byte address 0x4 - core index']
  #allocation1 [shape = 'u32[144,128]{1,0:T(1,128)}', space=vmem, size = 0x12000, scoped, tag = 'internal scratch']
  #allocation2 [shape = 'f32[72,256]{1,0:T(8,128)}', space=vmem, size = 0x12000, scoped, tag = 'scratch operand']
  %s0 = inlined_call_operand.vmem [shape: f32[8,256], index: 0, kind: input, shape index: {}]
  %s1 = inlined_call_operand.vmem [shape: bf16[8,72], index: 1, kind: input, shape index: {}]
  %s2 = inlined_call_operand.vmem [shape: f32[8,1], index: 2, kind: input, shape index: {}]
  %s3 = inlined_call_operand.vmem [shape: bf16[8,72], index: 3, kind: input, shape index: {}]
  %s4 = inlined_call_operand.vmem [shape: f32[8,1], index: 4, kind: input, shape index: {}]
  %s5 = inlined_call_operand.vmem [shape: f32[8,1], index: 5, kind: input, shape index: {}]
  %s6 = inlined_call_operand.vmem [shape: f32[8,1], index: 6, kind: input, shape index: {}]
  %s7 = inlined_call_operand.vmem [shape: f32[8,1], index: 7, kind: input, shape index: {}]
  %s8 = inlined_call_operand.vmem [shape: f32[8,1], index: 8, kind: input, shape index: {}]
  %s9 = inlined_call_operand.vmem [shape: f32[8,256], index: 9, kind: output, shape index: {}]
  %s10 = sld [smem:[#allocation0]]
  $region46: #{conv_cat_block_cin.1} parent=0
    _
  %s12 = ssub.s32 1, %s10
  %s13 = scalar_select 0, %s12, %s10
  // Predicated region
  $region2: #{conv_cat_block_cin.1} parent=0 // pred_check
    _
  $region3: #{conv_cat_block_cin.1} parent=0 // pred_check_branch
    %15 = sbr.rel (0) target = $region5
  $region4: #{conv_cat_block_cin.1} parent=0 // pred_region
    _
  $region5: #{conv_cat_block_cin.1} parent=0 // pred_fallthru
    _
  // Predicated region
  $region6: #{conv_cat_block_cin.1} parent=0 // pred_check
    _
  $region7: #{conv_cat_block_cin.1} parent=0 // pred_check_branch
    %17 = sbr.rel (0) target = $region9
  $region8: #{conv_cat_block_cin.1} parent=0 // pred_region
    _
  $region9: #{conv_cat_block_cin.1} parent=0 // pred_fallthru
    _
  // Predicated region
  $region10: #{conv_cat_block_cin.1} parent=0 // pred_check
    _
  $region11: #{conv_cat_block_cin.1} parent=0 // pred_check_branch
    %19 = sbr.rel (0) target = $region13
  $region12: #{conv_cat_block_cin.1} parent=0 // pred_region
    _
  $region13: #{conv_cat_block_cin.1} parent=0 // pred_fallthru
    _
  // Predicated region
  $region14: #{conv_cat_block_cin.1} parent=0 // pred_check
    _
  $region15: #{conv_cat_block_cin.1} parent=0 // pred_check_branch
    %21 = sbr.rel (0) target = $region17
  $region16: #{conv_cat_block_cin.1} parent=0 // pred_region
    _
  $region17: #{conv_cat_block_cin.1} parent=0 // pred_fallthru
    _
  // Predicated region
  $region18: #{conv_cat_block_cin.1} parent=0 // pred_check
    _
  $region19: #{conv_cat_block_cin.1} parent=0 // pred_check_branch
    %23 = sbr.rel (0) target = $region21
  $region20: #{conv_cat_block_cin.1} parent=0 // pred_region
    _
  $region21: #{conv_cat_block_cin.1} parent=0 // pred_fallthru
    _
  // Predicated region
  $region22: #{conv_cat_block_cin.1} parent=0 // pred_check
    _
  $region23: #{conv_cat_block_cin.1} parent=0 // pred_check_branch
    %25 = sbr.rel (0) target = $region25
  $region24: #{conv_cat_block_cin.1} parent=0 // pred_region
    _
  $region25: #{conv_cat_block_cin.1} parent=0 // pred_fallthru
    _
  // Predicated region
  $region26: #{conv_cat_block_cin.1} parent=0 // pred_check
    _
  $region27: #{conv_cat_block_cin.1} parent=0 // pred_check_branch
    %27 = sbr.rel (0) target = $region29
  $region28: #{conv_cat_block_cin.1} parent=0 // pred_region
    _
  $region29: #{conv_cat_block_cin.1} parent=0 // pred_fallthru
    _
  // Predicated region
  $region30: #{conv_cat_block_cin.1} parent=0 // pred_check
    _
  $region31: #{conv_cat_block_cin.1} parent=0 // pred_check_branch
    %29 = sbr.rel (0) target = $region33
  $region32: #{conv_cat_block_cin.1} parent=0 // pred_region
    _
  $region33: #{conv_cat_block_cin.1} parent=0 // pred_fallthru
    _
  // Predicated region
  $region34: #{conv_cat_block_cin.1} parent=0 // pred_check
    _
  $region35: #{conv_cat_block_cin.1} parent=0 // pred_check_branch
    %31 = sbr.rel (0) target = $region37
  $region36: #{conv_cat_block_cin.1} parent=0 // pred_region
    _
  $region37: #{conv_cat_block_cin.1} parent=0 // pred_fallthru
    _
  %v33 = vlaneseq
  %v34 = vand.u32 %v33, 127
  %v35 = vadd.s32 %v34, 128
  %vm36 = vcmp.lt.s32.totalorder %v34, 0
  %v37 = vsub.s32 0, %v34
  %v38 = vsel %vm36, %v37, %v34
  %v39 = vshrl.u32 %v38, 4
  %v40 = vand.u32 %v38, 15
  %v41 = vsub.s32 0, %v40
  %v42 = vsel %vm36, %v41, %v40
  %vm43 = vcmp.lt.s32.totalorder %v35, 0
  %v44 = vsub.s32 0, %v35
  %v45 = vsel %vm43, %v44, %v35
  %v46 = vshrl.u32 %v45, 4
  %v47 = vand.u32 %v45, 15
  %v48 = vsub.s32 0, %v47
  %v49 = vsel %vm43, %v48, %v47
  %vm50 = vcmp.ne.s32.totalorder %v42, 0
  %vm51 = vcmp.ne.s32.totalorder %v49, 0
  %vm52 = vcmp.lt.s32.totalorder %v42, 0
  %vm53 = vcmp.lt.s32.totalorder %v49, 0
  %vm54 = vmand %vm52, %vm50
  %vm55 = vmand %vm53, %vm51
  %v56 = vadd.s32 %v42, 16
  %v57 = vadd.s32 %v49, 16
  %v58 = vsel %vm54, %v56, %v42
  %v59 = vsel %vm55, %v57, %v49
  %vm60 = vcmp.eq.s32.totalorder %v58, 0
  %vm61 = vcmp.eq.s32.totalorder %v59, 0
  %vm62 = vcmp.eq.s32.totalorder %v58, 15
  %vm63 = vcmp.eq.s32.totalorder %v59, 15
  %v64 = vld [vmem:[%s0] sm:$0xff]
  %v65 = vld [vmem:[%s0 + $0x8] sm:$0xff]
  %66 = vrot.lane.b32.xlu0 %v64, 15
  %v67 = vpop.permute.xlu0 %66
  %68 = vrot.lane.b32.xlu0 %v65, 15
  %v69 = vpop.permute.xlu0 %68
  %vm70 = vcmp.lt.s32.totalorder %v34, 15
  %v71 = vsel %vm70, %v67, %v69
  %v72 = vsel %vm70, %v69, %v67
  %73 = vrot.lane.b32.xlu0 %v64, 127
  %v74 = vpop.permute.xlu0 %73
  %75 = vrot.lane.b32.xlu0 %v65, 127
  %v76 = vpop.permute.xlu0 %75
  %vm77 = vcmp.lt.s32.totalorder %v34, 127
  %v78 = vsel %vm77, %v74, %v76
  %v79 = vsel %vm77, %v76, %v74
  %v80 = vsel %vm62, %v72, %v78
  %v81 = vsel %vm63, %v71, %v79
  %82 = vrot.lane.b32.xlu0 %v64, 113
  %v83 = vpop.permute.xlu0 %82
  %84 = vrot.lane.b32.xlu0 %v65, 113
  %v85 = vpop.permute.xlu0 %84
  %vm86 = vcmp.lt.s32.totalorder %v34, 113
  %v87 = vsel %vm86, %v83, %v85
  %v88 = vsel %vm86, %v85, %v83
  %89 = vrot.lane.b32.xlu0 %v64, 1
  %v90 = vpop.permute.xlu0 %89
  %91 = vrot.lane.b32.xlu0 %v65, 1
  %v92 = vpop.permute.xlu0 %91
  %vm93 = vcmp.lt.s32.totalorder %v34, 1
  %v94 = vsel %vm93, %v90, %v92
  %v95 = vsel %vm93, %v92, %v90
  %v96 = vsel %vm60, %v87, %v95
  %v97 = vsel %vm61, %v88, %v94
  %98 = vrot.lane.b32.xlu0 %v96, 16
  %v99 = vpop.permute.xlu0 %98
  %100 = vrot.lane.b32.xlu0 %v97, 16
  %v101 = vpop.permute.xlu0 %100
  %vm102 = vcmp.lt.s32.totalorder %v34, 16
  %v103 = vsel %vm102, %v99, %v101
  %v104 = vsel %vm102, %v101, %v99
  %105 = vrot.lane.b32.xlu0 %v64, 16
  %v106 = vpop.permute.xlu0 %105
  %107 = vrot.lane.b32.xlu0 %v65, 16
  %v108 = vpop.permute.xlu0 %107
  %v109 = vsel %vm102, %v106, %v108
  %v110 = vsel %vm102, %v108, %v106
  %111 = vrot.lane.b32.xlu0 %v80, 16
  %v112 = vpop.permute.xlu0 %111
  %113 = vrot.lane.b32.xlu0 %v81, 16
  %v114 = vpop.permute.xlu0 %113
  %v115 = vsel %vm102, %v112, %v114
  %v116 = vsel %vm102, %v114, %v112
  %117 = vrot.lane.b32.xlu0 %v96, 112
  %v118 = vpop.permute.xlu0 %117
  %119 = vrot.lane.b32.xlu0 %v97, 112
  %v120 = vpop.permute.xlu0 %119
  %vm121 = vcmp.lt.s32.totalorder %v34, 112
  %v122 = vsel %vm121, %v118, %v120
  %v123 = vsel %vm121, %v120, %v118
  %124 = vrot.lane.b32.xlu0 %v64, 112
  %v125 = vpop.permute.xlu0 %124
  %126 = vrot.lane.b32.xlu0 %v65, 112
  %v127 = vpop.permute.xlu0 %126
  %v128 = vsel %vm121, %v125, %v127
  %v129 = vsel %vm121, %v127, %v125
  %130 = vrot.lane.b32.xlu0 %v80, 112
  %v131 = vpop.permute.xlu0 %130
  %132 = vrot.lane.b32.xlu0 %v81, 112
  %v133 = vpop.permute.xlu0 %132
  %v134 = vsel %vm121, %v131, %v133
  %v135 = vsel %vm121, %v133, %v131
  %136 = vst [vmem:[#allocation2] sm:$0xff] %v104
  %137 = vst [vmem:[#allocation2 + $0x8] sm:$0xff] %v103
  %138 = vst [vmem:[#allocation2 + $0x10] sm:$0xff] %v110
  %139 = vst [vmem:[#allocation2 + $0x18] sm:$0xff] %v109
  %140 = vst [vmem:[#allocation2 + $0x20] sm:$0xff] %v116
  %141 = vst [vmem:[#allocation2 + $0x28] sm:$0xff] %v115
  %142 = vst [vmem:[#allocation2 + $0x30] sm:$0xff] %v96
  %143 = vst [vmem:[#allocation2 + $0x38] sm:$0xff] %v97
  %144 = vst [vmem:[#allocation2 + $0x40] sm:$0xff] %v64
  %145 = vst [vmem:[#allocation2 + $0x48] sm:$0xff] %v65
  %146 = vst [vmem:[#allocation2 + $0x50] sm:$0xff] %v80
  %147 = vst [vmem:[#allocation2 + $0x58] sm:$0xff] %v81
  %148 = vst [vmem:[#allocation2 + $0x60] sm:$0xff] %v122
  %149 = vst [vmem:[#allocation2 + $0x68] sm:$0xff] %v123
  %150 = vst [vmem:[#allocation2 + $0x70] sm:$0xff] %v128
  %151 = vst [vmem:[#allocation2 + $0x78] sm:$0xff] %v129
  %152 = vst [vmem:[#allocation2 + $0x80] sm:$0xff] %v134
  %153 = vst [vmem:[#allocation2 + $0x88] sm:$0xff] %v135
  %v154 = vld [vmem:[%s1] sm:$0xf]
  %v155 = vld [vmem:[#allocation2] sm:$0xff]
  %v156 = vld [vmem:[#allocation2 + $0x8] sm:$0xff]
  %v157 = vld [vmem:[#allocation2 + $0x10] sm:$0xff]
  %v158 = vld [vmem:[#allocation2 + $0x18] sm:$0xff]
  %v159 = vld [vmem:[#allocation2 + $0x20] sm:$0xff]
  %v160 = vld [vmem:[#allocation2 + $0x28] sm:$0xff]
  %v161 = vld [vmem:[#allocation2 + $0x30] sm:$0xff]
  %v162 = vld [vmem:[#allocation2 + $0x38] sm:$0xff]
  %v163 = vld [vmem:[#allocation2 + $0x40] sm:$0xff]
  %v164 = vld [vmem:[#allocation2 + $0x48] sm:$0xff]
  %v165 = vld [vmem:[#allocation2 + $0x50] sm:$0xff]
  %v166 = vld [vmem:[#allocation2 + $0x58] sm:$0xff]
  %v167 = vld [vmem:[#allocation2 + $0x60] sm:$0xff]
  %v168 = vld [vmem:[#allocation2 + $0x68] sm:$0xff]
  %v169 = vld [vmem:[#allocation2 + $0x70] sm:$0xff]
  %v170 = vld [vmem:[#allocation2 + $0x78] sm:$0xff]
  %v171 = vld [vmem:[#allocation2 + $0x80] sm:$0xff]
  %v172 = vld [vmem:[#allocation2 + $0x88] sm:$0xff]
  %v173 = vpack.c.bf16 %v157, %v155
  %v174 = vpack.c.bf16 %v158, %v156
  %v175 = vpack.c.bf16 %v161, %v159
  %v176 = vpack.c.bf16 %v162, %v160
  %v177 = vpack.c.bf16 %v165, %v163
  %v178 = vpack.c.bf16 %v166, %v164
  %v179 = vpack.c.bf16 %v169, %v167
  %v180 = vpack.c.bf16 %v170, %v168
  %v181 = vpack.c.bf16 %v171, %v171
  %v182 = vpack.c.bf16 %v172, %v172
  %v183 = vld [vmem:[%s2] sm:$0xff]
  %185 = vset.pattern.permute.xlu0 0
  %186 = vperm.xlu0 %185, %v183
  %v187 = vpop.permute.xlu0 %186
  %vm189 = vcmask 588800
  %v191 = vsel %vm189, %v154, 0
  %vm193 = vcmask 1043456
  %v195 = vsel %vm193, %v181, 0
  %v198 = vsel %vm193, %v182, 0
  %200 = vmatprep.subr.bf16.mxu0 0
  %201 = vmatpush1.bf16.msra.mxu0 0
  %202 = vmatprep.subr.bf16.mxu0 0
  %203 = vmatpush1.bf16.msra.mxu0 0
  %204 = vmatprep.subr.bf16.mxu0 0
  %205 = vmatpush1.bf16.msra.mxu0 0
  %206 = vmatprep.subr.bf16.mxu0 %v198
  %207 = vmatpush1.bf16.msra.mxu0 %v195
  %208 = vmatprep.subr.bf16.mxu0 %v180
  %209 = vmatpush1.bf16.msra.mxu0 %v179
  %210 = vmatprep.subr.bf16.mxu0 %v178
  %211 = vmatpush1.bf16.msra.mxu0 %v177
  %212 = vmatprep.subr.bf16.mxu0 %v176
  %213 = vmatpush1.bf16.msra.mxu0 %v175
  %214 = vmatprep.subr.bf16.mxu0 %v174
  %215 = vmatpush1.bf16.msra.mxu0 %v173
  %216 = vmatprep.subr.bf16.mxu0 0
  %217 = vmatpush2.bf16.msra.mxu0 0
  %218 = vmatprep.subr.bf16.mxu0 0
  %219 = vmatpush2.bf16.msra.mxu0 0
  %220 = vmatprep.subr.bf16.mxu0 0
  %221 = vmatpush2.bf16.msra.mxu0 0
  %222 = vmatprep.subr.bf16.mxu0 0
  %223 = vmatpush2.bf16.msra.mxu0 0
  %224 = vmatprep.subr.bf16.mxu0 0
  %225 = vmatpush2.bf16.msra.mxu0 0
  %226 = vmatprep.subr.bf16.mxu0 0
  %227 = vmatpush2.bf16.msra.mxu0 0
  %228 = vmatprep.subr.bf16.mxu0 0
  %229 = vmatpush2.bf16.msra.mxu0 0
  %230 = vmatprep.subr.bf16.mxu0 0
  %231 = vmatpush2.bf16.msra.mxu0 0
  %232 = vmatprep.mubr.bf16.mxu0 0
  %233 = vmatmul.mubr.bf16.gmra.mxu0 %v191
  %v234 = vpop.f32.mrf.mxu0
  %v235 = vadd.f32 %v187, %v234
  %v236 = vpop.f32.mrf.mxu0
  %v237 = vadd.f32 %v187, %v236
  %v238 = vpop.f32.mrf.mxu0
  %v239 = vpop.f32.mrf.mxu0
  %240 = vdwg.mxu0
  %v241 = vld [vmem:[%s5] sm:$0xff]
  %v242 = vld [vmem:[%s6] sm:$0xff]
  %v243 = vadd.f32 %v235, %v237
  %244 = vadd.xlane.f32.xlu0 %v243
  %v245 = vpop.xlane.xlu0 %244
  %v246 = vmul.f32 %v235, %v235
  %v247 = vmul.f32 %v237, %v237
  %v248 = vadd.f32 %v246, %v247
  %249 = vadd.xlane.f32.xlu0 %v248
  %v250 = vpop.xlane.xlu0 %249
  %v251 = vmul.f32 %v245, 0.00390625
  %v252 = vmul.f32 %v250, 0.00390625
  %v253 = vmul.f32 %v251, %v251
  %v254 = vsub.f32 %v252, %v253
  %v255 = vsub.f32 %v235, %v251
  %v256 = vsub.f32 %v237, %v251
  %v257 = vadd.f32 %v254, 1e-05
  %v258 = vrsqrt.pop %v257
  %v259 = vmul.f32 %v255, %v258
  %v260 = vmul.f32 %v256, %v258
  %262 = vset.pattern.permute.xlu0 0
  %263 = vperm.xlu0 %262, %v241
  %v264 = vpop.permute.xlu0 %263
  %v266 = vmul.f32 %v259, %v264
  %v267 = vmul.f32 %v260, %v264
  %269 = vset.pattern.permute.xlu0 0
  %270 = vperm.xlu0 %269, %v242
  %v271 = vpop.permute.xlu0 %270
  %v273 = vadd.f32 %v266, %v271
  %v274 = vadd.f32 %v267, %v271
  %v275 = vmax.f32 %v273, 0.0
  %v276 = vmax.f32 %v274, 0.0
  %277 = vrot.lane.b32.xlu0 %v275, 15
  %v278 = vpop.permute.xlu0 %277
  %279 = vrot.lane.b32.xlu0 %v276, 15
  %v280 = vpop.permute.xlu0 %279
  %v281 = vsel %vm70, %v278, %v280
  %v282 = vsel %vm70, %v280, %v278
  %283 = vrot.lane.b32.xlu0 %v275, 127
  %v284 = vpop.permute.xlu0 %283
  %285 = vrot.lane.b32.xlu0 %v276, 127
  %v286 = vpop.permute.xlu0 %285
  %v287 = vsel %vm77, %v284, %v286
  %v288 = vsel %vm77, %v286, %v284
  %v289 = vsel %vm62, %v282, %v287
  %v290 = vsel %vm63, %v281, %v288
  %291 = vrot.lane.b32.xlu0 %v275, 113
  %v292 = vpop.permute.xlu0 %291
  %293 = vrot.lane.b32.xlu0 %v276, 113
  %v294 = vpop.permute.xlu0 %293
  %v295 = vsel %vm86, %v292, %v294
  %v296 = vsel %vm86, %v294, %v292
  %297 = vrot.lane.b32.xlu0 %v275, 1
  %v298 = vpop.permute.xlu0 %297
  %299 = vrot.lane.b32.xlu0 %v276, 1
  %v300 = vpop.permute.xlu0 %299
  %v301 = vsel %vm93, %v298, %v300
  %v302 = vsel %vm93, %v300, %v298
  %v303 = vsel %vm60, %v295, %v302
  %v304 = vsel %vm61, %v296, %v301
  %305 = vrot.lane.b32.xlu0 %v303, 16
  %v306 = vpop.permute.xlu0 %305
  %307 = vrot.lane.b32.xlu0 %v304, 16
  %v308 = vpop.permute.xlu0 %307
  %v309 = vsel %vm102, %v306, %v308
  %v310 = vsel %vm102, %v308, %v306
  %311 = vrot.lane.b32.xlu0 %v275, 16
  %v312 = vpop.permute.xlu0 %311
  %313 = vrot.lane.b32.xlu0 %v276, 16
  %v314 = vpop.permute.xlu0 %313
  %v315 = vsel %vm102, %v312, %v314
  %v316 = vsel %vm102, %v314, %v312
  %317 = vrot.lane.b32.xlu0 %v289, 16
  %v318 = vpop.permute.xlu0 %317
  %319 = vrot.lane.b32.xlu0 %v290, 16
  %v320 = vpop.permute.xlu0 %319
  %v321 = vsel %vm102, %v318, %v320
  %v322 = vsel %vm102, %v320, %v318
  %323 = vrot.lane.b32.xlu0 %v303, 112
  %v324 = vpop.permute.xlu0 %323
  %325 = vrot.lane.b32.xlu0 %v304, 112
  %v326 = vpop.permute.xlu0 %325
  %v327 = vsel %vm121, %v324, %v326
  %v328 = vsel %vm121, %v326, %v324
  %329 = vrot.lane.b32.xlu0 %v275, 112
  %v330 = vpop.permute.xlu0 %329
  %331 = vrot.lane.b32.xlu0 %v276, 112
  %v332 = vpop.permute.xlu0 %331
  %v333 = vsel %vm121, %v330, %v332
  %v334 = vsel %vm121, %v332, %v330
  %335 = vrot.lane.b32.xlu0 %v289, 112
  %v336 = vpop.permute.xlu0 %335
  %337 = vrot.lane.b32.xlu0 %v290, 112
  %v338 = vpop.permute.xlu0 %337
  %v339 = vsel %vm121, %v336, %v338
  %v340 = vsel %vm121, %v338, %v336
  %341 = vst [vmem:[#allocation2] sm:$0xff] %v310
  %342 = vst [vmem:[#allocation2 + $0x8] sm:$0xff] %v309
  %343 = vst [vmem:[#allocation2 + $0x10] sm:$0xff] %v316
  %344 = vst [vmem:[#allocation2 + $0x18] sm:$0xff] %v315
  %345 = vst [vmem:[#allocation2 + $0x20] sm:$0xff] %v322
  %346 = vst [vmem:[#allocation2 + $0x28] sm:$0xff] %v321
  %347 = vst [vmem:[#allocation2 + $0x30] sm:$0xff] %v303
  %348 = vst [vmem:[#allocation2 + $0x38] sm:$0xff] %v304
  %349 = vst [vmem:[#allocation2 + $0x40] sm:$0xff] %v275
  %350 = vst [vmem:[#allocation2 + $0x48] sm:$0xff] %v276
  %351 = vst [vmem:[#allocation2 + $0x50] sm:$0xff] %v289
  %352 = vst [vmem:[#allocation2 + $0x58] sm:$0xff] %v290
  %353 = vst [vmem:[#allocation2 + $0x60] sm:$0xff] %v327
  %354 = vst [vmem:[#allocation2 + $0x68] sm:$0xff] %v328
  %355 = vst [vmem:[#allocation2 + $0x70] sm:$0xff] %v333
  %356 = vst [vmem:[#allocation2 + $0x78] sm:$0xff] %v334
  %357 = vst [vmem:[#allocation2 + $0x80] sm:$0xff] %v339
  %358 = vst [vmem:[#allocation2 + $0x88] sm:$0xff] %v340
  %v359 = vld [vmem:[%s3] sm:$0xf]
  %v360 = vld [vmem:[#allocation2] sm:$0xff]
  %v361 = vld [vmem:[#allocation2 + $0x8] sm:$0xff]
  %v362 = vld [vmem:[#allocation2 + $0x10] sm:$0xff]
  %v363 = vld [vmem:[#allocation2 + $0x18] sm:$0xff]
  %v364 = vld [vmem:[#allocation2 + $0x20] sm:$0xff]
  %v365 = vld [vmem:[#allocation2 + $0x28] sm:$0xff]
  %v366 = vld [vmem:[#allocation2 + $0x30] sm:$0xff]
  %v367 = vld [vmem:[#allocation2 + $0x38] sm:$0xff]
  %v368 = vld [vmem:[#allocation2 + $0x40] sm:$0xff]
  %v369 = vld [vmem:[#allocation2 + $0x48] sm:$0xff]
  %v370 = vld [vmem:[#allocation2 + $0x50] sm:$0xff]
  %v371 = vld [vmem:[#allocation2 + $0x58] sm:$0xff]
  %v372 = vld [vmem:[#allocation2 + $0x60] sm:$0xff]
  %v373 = vld [vmem:[#allocation2 + $0x68] sm:$0xff]
  %v374 = vld [vmem:[#allocation2 + $0x70] sm:$0xff]
  %v375 = vld [vmem:[#allocation2 + $0x78] sm:$0xff]
  %v376 = vld [vmem:[#allocation2 + $0x80] sm:$0xff]
  %v377 = vld [vmem:[#allocation2 + $0x88] sm:$0xff]
  %v378 = vpack.c.bf16 %v362, %v360
  %v379 = vpack.c.bf16 %v363, %v361
  %v380 = vpack.c.bf16 %v366, %v364
  %v381 = vpack.c.bf16 %v367, %v365
  %v382 = vpack.c.bf16 %v370, %v368
  %v383 = vpack.c.bf16 %v371, %v369
  %v384 = vpack.c.bf16 %v374, %v372
  %v385 = vpack.c.bf16 %v375, %v373
  %v386 = vpack.c.bf16 %v376, %v376
  %v387 = vpack.c.bf16 %v377, %v377
  %v388 = vld [vmem:[%s4] sm:$0xff]
  %390 = vset.pattern.permute.xlu0 0
  %391 = vperm.xlu0 %390, %v388
  %v392 = vpop.permute.xlu0 %391
  %v395 = vsel %vm189, %v359, 0
  %v398 = vsel %vm193, %v386, 0
  %v401 = vsel %vm193, %v387, 0
  %403 = vmatprep.subr.bf16.mxu0 0
  %404 = vmatpush1.bf16.msra.mxu0 0
  %405 = vmatprep.subr.bf16.mxu0 0
  %406 = vmatpush1.bf16.msra.mxu0 0
  %407 = vmatprep.subr.bf16.mxu0 0
  %408 = vmatpush1.bf16.msra.mxu0 0
  %409 = vmatprep.subr.bf16.mxu0 %v401
  %410 = vmatpush1.bf16.msra.mxu0 %v398
  %411 = vmatprep.subr.bf16.mxu0 %v385
  %412 = vmatpush1.bf16.msra.mxu0 %v384
  %413 = vmatprep.subr.bf16.mxu0 %v383
  %414 = vmatpush1.bf16.msra.mxu0 %v382
  %415 = vmatprep.subr.bf16.mxu0 %v381
  %416 = vmatpush1.bf16.msra.mxu0 %v380
  %417 = vmatprep.subr.bf16.mxu0 %v379
  %418 = vmatpush1.bf16.msra.mxu0 %v378
  %419 = vmatprep.subr.bf16.mxu0 0
  %420 = vmatpush2.bf16.msra.mxu0 0
  %421 = vmatprep.subr.bf16.mxu0 0
  %422 = vmatpush2.bf16.msra.mxu0 0
  %423 = vmatprep.subr.bf16.mxu0 0
  %424 = vmatpush2.bf16.msra.mxu0 0
  %425 = vmatprep.subr.bf16.mxu0 0
  %426 = vmatpush2.bf16.msra.mxu0 0
  %427 = vmatprep.subr.bf16.mxu0 0
  %428 = vmatpush2.bf16.msra.mxu0 0
  %429 = vmatprep.subr.bf16.mxu0 0
  %430 = vmatpush2.bf16.msra.mxu0 0
  %431 = vmatprep.subr.bf16.mxu0 0
  %432 = vmatpush2.bf16.msra.mxu0 0
  %433 = vmatprep.subr.bf16.mxu0 0
  %434 = vmatpush2.bf16.msra.mxu0 0
  %435 = vmatprep.mubr.bf16.mxu0 0
  %436 = vmatmul.mubr.bf16.gmra.mxu0 %v395
  %v437 = vpop.f32.mrf.mxu0
  %v438 = vadd.f32 %v392, %v437
  %v439 = vpop.f32.mrf.mxu0
  %v440 = vadd.f32 %v392, %v439
  %v441 = vpop.f32.mrf.mxu0
  %v442 = vpop.f32.mrf.mxu0
  %443 = vdwg.mxu0
  %v444 = vld [vmem:[%s7] sm:$0xff]
  %v445 = vld [vmem:[%s8] sm:$0xff]
  %v446 = vadd.f32 %v438, %v440
  %447 = vadd.xlane.f32.xlu0 %v446
  %v448 = vpop.xlane.xlu0 %447
  %v449 = vmul.f32 %v438, %v438
  %v450 = vmul.f32 %v440, %v440
  %v451 = vadd.f32 %v449, %v450
  %452 = vadd.xlane.f32.xlu0 %v451
  %v453 = vpop.xlane.xlu0 %452
  %v454 = vmul.f32 %v448, 0.00390625
  %v455 = vmul.f32 %v453, 0.00390625
  %v456 = vmul.f32 %v454, %v454
  %v457 = vsub.f32 %v455, %v456
  %v458 = vsub.f32 %v438, %v454
  %v459 = vsub.f32 %v440, %v454
  %v460 = vadd.f32 %v457, 1e-05
  %v461 = vrsqrt.pop %v460
  %v462 = vmul.f32 %v458, %v461
  %v463 = vmul.f32 %v459, %v461
  %465 = vset.pattern.permute.xlu0 0
  %466 = vperm.xlu0 %465, %v444
  %v467 = vpop.permute.xlu0 %466
  %v469 = vmul.f32 %v462, %v467
  %v470 = vmul.f32 %v463, %v467
  %472 = vset.pattern.permute.xlu0 0
  %473 = vperm.xlu0 %472, %v445
  %v474 = vpop.permute.xlu0 %473
  %v476 = vadd.f32 %v469, %v474
  %v477 = vadd.f32 %v470, %v474
  %478 = vst [vmem:[%s9] sm:$0xff] %v476
  %479 = vst [vmem:[%s9 + $0x8] sm:$0xff] %v477
  // Predicated region
  $region38: #{conv_cat_block_cin.1} parent=0 // pred_check
    _
  $region39: #{conv_cat_block_cin.1} parent=0 // pred_check_branch
    %481 = sbr.rel (0) target = $region41
  $region40: #{conv_cat_block_cin.1} parent=0 // pred_region
    _
  $region41: #{conv_cat_block_cin.1} parent=0 // pred_fallthru
    _
  // Predicated region
  $region42: #{conv_cat_block_cin.1} parent=0 // pred_check
    _
  $region43: #{conv_cat_block_cin.1} parent=0 // pred_check_branch
    %483 = sbr.rel (0) target = $region45
  $region44: #{conv_cat_block_cin.1} parent=0 // pred_region
    _
  $region45: #{conv_cat_block_cin.1} parent=0 // pred_fallthru
    _

</llo_original>
